<compile_context>
chip_gen: v7x
topology: tpu7x:2x2x1
jax: 0.10.0
libtpu: 0.0.40
codegen_flags: <defaults>
</compile_context>

<pallas_src>
import math

import jax
import jax.numpy as jnp
from jax.experimental import pallas as pl
from jax.experimental.pallas import tpu as pltpu

_TARGET_TILE_BYTES = 2 * 1024 * 1024   # ~2 MiB/tile -> 8 MiB with in+out double-buffering
_MIN_SPLIT_BYTES = 1 * 1024 * 1024     # above this, force a multi-step grid
_MIN_GRID_STEPS = 4                    # pipelining + v7x dual-TC sharding


def _scale_kernel(scale_ref, x_ref, o_ref):
    # scale_ref: (1,) f32 in SMEM;  x_ref/o_ref: (block_rows, lane) tile in VMEM.
    # Multiply in f32, round once to the output dtype (matches torch promotion).
    o_ref[...] = (x_ref[...].astype(jnp.float32) * scale_ref[0]).astype(o_ref.dtype)


def _scale_2d(scale_arg, x2d, sublane):
    """Run the tiled kernel on a lane-dense (rows, lane) slab."""
    rows, lane = x2d.shape
    dtype = x2d.dtype
    itemsize = jnp.dtype(dtype).itemsize
    bytes_per_row = lane * itemsize

    # ~2 MiB worth of rows, rounded down to the sublane tile.
    tgt_rows = max(sublane, (_TARGET_TILE_BYTES // bytes_per_row) // sublane * sublane)

    # Guarantee >= _MIN_GRID_STEPS grid steps for medium/large tensors so
    # DMA/compute overlap and the parallel axis can shard across v7x's 2 TCs.
    total_bytes = rows * bytes_per_row
    if total_bytes > _MIN_SPLIT_BYTES:
        cap = max(sublane, (rows // _MIN_GRID_STEPS) // sublane * sublane)
        tgt_rows = min(tgt_rows, cap)

    if tgt_rows >= rows:
        # Single block covering the whole array (block == full dims, always legal).
        block_rows = rows
    else:
        # Sublane-aligned tile; the last block may be partial (Pallas bounds the DMA).
        block_rows = tgt_rows

    grid = (pl.cdiv(rows, block_rows),)

    return pl.pallas_call(
        _scale_kernel,
        out_shape=jax.ShapeDtypeStruct((rows, lane), dtype),
        grid_spec=pl.GridSpec(
            grid=grid,
            in_specs=[
                pl.BlockSpec(memory_space=pltpu.SMEM),                # scale (1,) f32
                pl.BlockSpec((block_rows, lane), lambda i: (i, 0)),   # x tile
            ],
            out_specs=pl.BlockSpec((block_rows, lane), lambda i: (i, 0)),
        ),
        compiler_params=pltpu.CompilerParams(
            dimension_semantics=("parallel",),
        ),
    )(scale_arg, x2d)


def scale_layer(x, scale):
    """Elementwise x * scale (scale is a shape-(1,) f32 parameter)."""
    orig_shape = x.shape
    dtype = x.dtype
    total = math.prod(orig_shape)

    itemsize = jnp.dtype(dtype).itemsize
    # Sublane tile: 8 rows for 4-byte dtypes, 16 for 2-byte, 32 for 1-byte.
    sublane = max(8, 32 // itemsize)

    scale_arg = jnp.asarray(scale, dtype=jnp.float32).reshape(1)

    # Widest lane width in {512, 256, 128} that divides the element count:
    # the lane-dense reshape is then a free metadata op (no padding, no copy).
    lane = None
    for cand in (512, 256, 128):
        if total % cand == 0:
            lane = cand
            break

    if lane is not None:
        rows = total // lane
        x2d = x.reshape(rows, lane)                     # free reshape
        out2d = _scale_2d(scale_arg, x2d, sublane)
        return out2d.reshape(orig_shape)

    # Ragged fallback (total not a multiple of 128): pad to a full lane row,
    # slice the tail off afterwards.  Only hit for unusual shapes.
    lane = 128
    rows = pl.cdiv(total, lane)
    pad = rows * lane - total
    flat = jnp.pad(x.reshape(-1), (0, pad))
    x2d = flat.reshape(rows, lane)
    out2d = _scale_2d(scale_arg, x2d, sublane)
    return out2d.reshape(-1)[:total].reshape(orig_shape)


if __name__ == "__main__":
    key = jax.random.PRNGKey(0)

    # NCHW input, same convention as the PyTorch module's typical use.
    x = jax.random.normal(key, (2, 4, 16, 16), dtype=jnp.float32)

    # nn.Parameter(torch.FloatTensor([init_value])) with a non-trivial value.
    scale = jnp.array([1.0], dtype=jnp.float32) * 2.5

    y = jax.block_until_ready(scale_layer(x, scale))
    ref = x * scale[0]
    assert y.shape == x.shape and y.dtype == x.dtype
    assert jnp.allclose(y, ref, atol=1e-6, rtol=1e-6)

    # Larger multi-tile shape: exercises the multi-step parallel grid.
    x_big = jax.random.normal(jax.random.PRNGKey(1), (8, 32, 64, 64), dtype=jnp.float32)
    y_big = jax.block_until_ready(scale_layer(x_big, scale))
    assert jnp.allclose(y_big, x_big * scale[0], atol=1e-6, rtol=1e-6)

    # bf16 input: multiply in f32, round once (matches torch promotion).
    x_bf16 = jax.random.normal(jax.random.PRNGKey(2), (2, 4, 16, 16)).astype(jnp.bfloat16)
    y_bf16 = jax.block_until_ready(scale_layer(x_bf16, scale))
    ref_bf16 = (x_bf16.astype(jnp.float32) * scale[0]).astype(jnp.bfloat16)
    assert y_bf16.dtype == jnp.bfloat16
    assert jnp.array_equal(y_bf16, ref_bf16)

    # Ragged shape (total % 128 != 0): exercises the fallback pad/slice path.
    x_rag = jax.random.normal(jax.random.PRNGKey(3), (3, 5, 7), dtype=jnp.float32)
    y_rag = jax.block_until_ready(scale_layer(x_rag, scale))
    assert jnp.allclose(y_rag, x_rag * scale[0], atol=1e-6, rtol=1e-6)

    print("KERNEL_OK")
</pallas_src>

<mosaic_0001>
module attributes {stable_mosaic.version = 11 : i64} {
  func.func @_scale_kernel(%arg0: i32, %arg1: memref<1xf32, #tpu.memory_space<smem>>, %arg2: memref<4x512xf32, #tpu.memory_space<vmem>>, %arg3: memref<4x512xf32, #tpu.memory_space<vmem>>) attributes {dimension_semantics = [#tpu.dimension_semantics<parallel>], iteration_bounds = array<i64: 1>, scalar_prefetch = 0 : i64, scratch_operands = 0 : i64, tpu.core_type = #tpu.core_type<tc>, window_params = [{transform_indices = @transform_0, window_bounds = array<i64: 1>}, {transform_indices = @transform_1, window_bounds = array<i64: 4, 512>}, {transform_indices = @transform_2, window_bounds = array<i64: 4, 512>}]} {
    %c0 = arith.constant 0 : index
    %c0_0 = arith.constant 0 : index
    %0 = vector.load %arg2[%c0, %c0_0] : memref<4x512xf32, #tpu.memory_space<vmem>>, vector<4x512xf32>
    %c0_1 = arith.constant 0 : index
    %1 = memref.load %arg1[%c0_1] : memref<1xf32, #tpu.memory_space<smem>>
    %2 = vector.broadcast %1 : f32 to vector<4x512xf32>
    %3 = arith.mulf %0, %2 : vector<4x512xf32>
    %c0_2 = arith.constant 0 : index
    %c0_3 = arith.constant 0 : index
    %4 = vector.load %arg3[%c0_2, %c0_3] : memref<4x512xf32, #tpu.memory_space<vmem>>, vector<4x512xf32>
    tpu.vector_store %arg3[%c0_2, %c0_3], %3 {strides = array<i32>} : memref<4x512xf32, #tpu.memory_space<vmem>>, vector<4x512xf32>,
    return
  }
  func.func @transform_0(%arg0: i32) -> i32 {
    %c0_i32 = arith.constant 0 : i32
    %c0_i32_0 = arith.constant 0 : i32
    return %c0_i32 : i32
  }
  func.func @transform_1(%arg0: i32) -> (i32, i32) {
    %c0_i32 = arith.constant 0 : i32
    %c0_i32_0 = arith.constant 0 : i32
    return %arg0, %c0_i32 : i32, i32
  }
  func.func @transform_2(%arg0: i32) -> (i32, i32) {
    %c0_i32 = arith.constant 0 : i32
    %c0_i32_0 = arith.constant 0 : i32
    return %arg0, %c0_i32 : i32, i32
  }
}

</mosaic_0001>

<llo_original>
// kernel: tpu_custom_call.1
$region0: #{tpu_custom_call.1}
  #allocation0 [shape = 'u32[]', space=smem, size = 0x4, offset = 0x4, fixed_abs, tag = 'smem constant byte address 0x4 - core index']
  #allocation1 [shape = 'u32[144,128]{1,0:T(1,128)}', space=vmem, size = 0x12000, scoped, tag = 'internal scratch']
  #allocation2 [shape = 'f32[1]{0:T(128)S(6)}', space=smem, size = 0x200, scoped, tag = 'scoped memory for tpu_custom_call.1']
  %s0 = inlined_call_operand.<no memory space> [shape: f32[1], index: 0, kind: input, shape index: {}]
  %s1 = inlined_call_operand.hbm [shape: f32[4,512], index: 1, kind: input, shape index: {}]
  %s2 = inlined_call_operand.hbm [shape: f32[4,512], index: 2, kind: output, shape index: {}]
  %s3 = sld [smem:[#allocation0]]
  $region22: #{tpu_custom_call.1} parent=0
    _
  %s5 = ssub.s32 1, %s3
  %s6 = scalar_select 0, %s5, %s3
  %7 = sst [smem:[#allocation2]] %s0
  $region1: #{tpu_custom_call.1} parent=0
    #allocation3 [shape = 'u8[8192]{0}', space=vmem, size = 0x2000, scoped, tag = 'input window, operand 1, single buffered']
    #allocation4 [shape = 's32[1]{0}', space=sflag, size = 0x4, scoped, tag = 'scoped memory for tpu_custom_call.1']
    #allocation5 [shape = 's32[1]{0}', space=sflag, size = 0x4, scoped, tag = 'scoped memory for tpu_custom_call.1']
    #allocation6 [shape = 'u8[8192]{0}', space=vmem, size = 0x2000, scoped, tag = 'output window, operand 0, single buffered']
    %8 = vsyncpa [#allocation4], 0
    %9 = vsyncpa [#allocation5], 0
    // Predicated region
    $region2: #{tpu_custom_call.1} parent=1 // pred_check
      _
    $region3: #{tpu_custom_call.1} parent=1 // pred_check_branch
      %11 = sbr.rel (0) target = $region5
    $region4: #{tpu_custom_call.1} parent=1 // pred_region
      _
    $region5: #{tpu_custom_call.1} parent=1 // pred_fallthru
      _
    // Predicated region
    $region6: #{tpu_custom_call.1} parent=1 // pred_check
      _
    $region7: #{tpu_custom_call.1} parent=1 // pred_check_branch
      %13 = sbr.rel (0) target = $region9
    $region8: #{tpu_custom_call.1} parent=1 // pred_region
      %s15 = ssub.s32 256, 256
      %16 = vsyncadd [#allocation4], %s15
      %s18 = sshll.u32 [#allocation3], 4
      %s19 = int_to_ptr.vmem [resolvable:$true] %s18
      %21 = dma.hbm_to_vmem [thread:$0]  %s1, 256, %s19, [#allocation4]
    $region9: #{tpu_custom_call.1} parent=1 // pred_fallthru
      _
    // Predicated region
    $region10: #{tpu_custom_call.1} parent=1 // pred_check
      _
    $region11: #{tpu_custom_call.1} parent=1 // pred_check_branch
      %23 = sbr.rel (0) target = $region13
    $region12: #{tpu_custom_call.1} parent=1 // pred_region
      %24 = dma.done [#allocation4], 256
    $region13: #{tpu_custom_call.1} parent=1 // pred_fallthru
      _
    %v25 = vld [vmem:[#allocation3] sm:$0xff]
    %v26 = vld [vmem:[#allocation3 + $0x8] sm:$0xff]
    %s27 = sld [smem:[#allocation2]]
    %v28 = vstv %s27
    %v29 = vmul.f32 %v25, %v28
    %v30 = vmul.f32 %v26, %v28
    %31 = vst [vmem:[#allocation6] sm:$0xff] %v29
    %32 = vst [vmem:[#allocation6 + $0x8] sm:$0xff] %v30
    // Predicated region
    $region14: #{tpu_custom_call.1} parent=1 // pred_check
      _
    $region15: #{tpu_custom_call.1} parent=1 // pred_check_branch
      %34 = sbr.rel (0) target = $region17
    $region16: #{tpu_custom_call.1} parent=1 // pred_region
      %s36 = ssub.s32 256, 256
      %37 = vsyncadd [#allocation5], %s36
      %s39 = sshll.u32 [#allocation6], 4
      %s40 = int_to_ptr.vmem [resolvable:$true] %s39
      %42 = dma.vmem_to_hbm [thread:$0]  %s40, 256, %s2, [#allocation5]
    $region17: #{tpu_custom_call.1} parent=1 // pred_fallthru
      _
    // Predicated region
    $region18: #{tpu_custom_call.1} parent=1 // pred_check
      _
    $region19: #{tpu_custom_call.1} parent=1 // pred_check_branch
      %44 = sbr.rel (0) target = $region21
    $region20: #{tpu_custom_call.1} parent=1 // pred_region
      %45 = dma.done [#allocation5], 256
    $region21: #{tpu_custom_call.1} parent=1 // pred_fallthru
      _
    %46 = vsyncpa [#allocation4], 1
    %47 = vsyncpa [#allocation5], 1

</llo_original>
